<compile_context>
chip_gen: v7x
topology: tpu7x:2x2x1
jax: 0.10.0
libtpu: 0.0.40
codegen_flags: <defaults>
</compile_context>

<pallas_src>
import jax
import jax.numpy as jnp
from jax import lax
from jax.experimental import pallas as pl
from jax.experimental.pallas import tpu as pltpu


_LANES = 128
_PALLAS_MIN_BYTES = 4 * 1024 * 1024     # below this (per factor) plain jnp wins
_VMEM_BUDGET_BYTES = 24 * 1024 * 1024   # 2x double-buffered input tile + f32 accumulator
_VMEM_LIMIT_BYTES = 32 * 1024 * 1024    # explicit scoped-VMEM limit (safe on v5e/v6e/v7x)
_MAX_TM = 8192                          # 8192 x 128 f32 = 4 MiB active block
_NUM_SPLITS = 2                         # leading "parallel" axis -> 2 TCs on v7x; no-op on 1-TC chips


def _pick_tm(rows, itemsize, tm):
    """Row tile: as big as the VMEM budget / cap allows; full-extent if it covers the array."""
    if tm is None:
        per_row_bytes = _LANES * (2 * itemsize + 4)   # double-buffered input + f32 acc
        tm = min(_VMEM_BUDGET_BYTES // per_row_bytes, _MAX_TM)
    if tm >= rows:
        return rows                     # single full-extent block: no row masking needed
    return max(32, (tm // 32) * 32)     # multiple of 32: safe sublanes for f32/bf16/int8


def _make_sumsq_kernel(tm, tiles_per_split, rows_total, n_full_tiles, has_edge):
    """Grid (split, row_tile): acc += x*x per tile; one reduce + store per split."""

    def kernel(x_ref, o_ref, acc_ref):
        i = pl.program_id(1)

        @pl.when(i == 0)
        def _init():
            acc_ref[...] = jnp.zeros_like(acc_ref)

        t = pl.program_id(0) * tiles_per_split + i   # global row-tile index

        def _accumulate(masked):
            x = x_ref[...].astype(jnp.float32)       # cast in-kernel: HBM reads stay narrow
            if masked:
                # Zero rows past the real end of the array (ragged / padding tiles).
                row = t * tm + lax.broadcasted_iota(jnp.int32, x.shape, 0)
                x = jnp.where(row < rows_total, x, 0.0)
            acc_ref[...] += x * x                    # purely elementwise: stays on the VPU

        if has_edge:
            @pl.when(t < n_full_tiles)
            def _full_tile():
                _accumulate(masked=False)

            @pl.when(t >= n_full_tiles)
            def _edge_tile():
                _accumulate(masked=True)
        else:
            _accumulate(masked=False)

        @pl.when(i == pl.num_programs(1) - 1)
        def _finalize():
            # One cross-lane reduce per split; broadcast into this split's (8,128) block.
            o_ref[...] = jnp.zeros_like(o_ref) + jnp.sum(acc_ref[...])

    return kernel


def _pallas_sum_of_squares(x2d, tm=None):
    """sum(x**2) over a lane-dense (R, 128) array, accumulated in f32."""
    rows = x2d.shape[0]
    itemsize = jnp.dtype(x2d.dtype).itemsize
    tm = _pick_tm(rows, itemsize, tm)

    n_tiles = pl.cdiv(rows, tm)
    num_splits = _NUM_SPLITS if n_tiles >= _NUM_SPLITS else 1
    tiles_per_split = pl.cdiv(n_tiles, num_splits)
    n_full_tiles = rows // tm
    has_edge = (rows % tm != 0) or (num_splits * tiles_per_split != n_tiles)

    def in_index_map(c, i):
        t = c * tiles_per_split + i
        # Padding steps (when n_tiles doesn't split evenly) clamp onto the last real
        # block; their contribution is fully masked off inside the kernel.
        return (jnp.minimum(t, n_tiles - 1), 0)

    out = pl.pallas_call(
        _make_sumsq_kernel(tm, tiles_per_split, rows, n_full_tiles, has_edge),
        out_shape=jax.ShapeDtypeStruct((num_splits * 8, _LANES), jnp.float32),
        grid=(num_splits, tiles_per_split),
        in_specs=[pl.BlockSpec((tm, _LANES), in_index_map)],
        out_specs=pl.BlockSpec((8, _LANES), lambda c, i: (c, 0)),
        scratch_shapes=[pltpu.VMEM((tm, _LANES), jnp.float32)],
        compiler_params=pltpu.CompilerParams(
            dimension_semantics=("parallel", "arbitrary"),
            vmem_limit_bytes=_VMEM_LIMIT_BYTES,
        ),
    )(x2d)
    # Each split wrote its partial sum broadcast over its own (8, 128) block.
    return jnp.sum(out[::8, 0])


def _sum_of_squares(factors, *, min_pallas_bytes=_PALLAS_MIN_BYTES, tm=None):
    """Total sum(f**2) across all factors, accumulated in f32."""
    total = jnp.float32(0.0)
    for f in factors:
        f = jnp.asarray(f)
        if f.size == 0:
            continue
        nbytes = f.size * jnp.dtype(f.dtype).itemsize
        if nbytes < min_pallas_bytes or f.size < _LANES:
            # Tiny factor: XLA's fused square+reduce is already at roofline; skip the launch.
            total = total + jnp.sum(jnp.square(f.astype(jnp.float32)))
            continue
        flat = f.reshape(-1)                                       # free: contiguous row-major
        n_main = (flat.shape[0] // _LANES) * _LANES
        main = flat[:n_main].reshape(n_main // _LANES, _LANES)     # lane-dense view
        total = total + _pallas_sum_of_squares(main, tm=tm)
        if n_main != flat.shape[0]:
            tail = flat[n_main:].astype(jnp.float32)               # < 128 leftover elements
            total = total + jnp.sum(jnp.square(tail))
    return total


class L2:
    """L2 regularizer for embeddings (no time regularization)."""

    def __init__(self, weight, min_pallas_bytes=_PALLAS_MIN_BYTES):
        self.weight = float(weight)
        self.min_pallas_bytes = int(min_pallas_bytes)

    def __call__(self, factors):
        factors = tuple(factors)
        n_samples = factors[0].shape[0]
        # weight * sum((|f| ** 2) ** 1 / 2)  ==  weight * 0.5 * sum(f ** 2)
        total = _sum_of_squares(factors, min_pallas_bytes=self.min_pallas_bytes)
        return (self.weight * 0.5) * total / n_samples

    forward = __call__


def _reference_l2(weight, factors):
    norm = jnp.float32(0.0)
    for f in factors:
        f32 = jnp.asarray(f, jnp.float32)
        norm = norm + weight * jnp.sum((jnp.abs(f32) ** 2) ** 1 / 2)
    return norm / factors[0].shape[0]


if __name__ == "__main__":
    key = jax.random.PRNGKey(0)
    k1, k2, k3, k4 = jax.random.split(key, 4)

    # Embedding factors (num_samples, rank).
    B, R = 1000, 128
    lhs = jax.random.normal(k1, (B, R), dtype=jnp.float32)
    rel = jax.random.normal(k2, (B, R), dtype=jnp.float32)
    rhs = jax.random.normal(k3, (B, R), dtype=jnp.float32)
    factors = (lhs, rel, rhs)
    weight = 0.01

    ref = _reference_l2(weight, factors)

    # 1) Pallas path (threshold lowered so these 512 KiB factors go through the kernel):
    #    single full-extent block per factor.
    reg = L2(weight, min_pallas_bytes=0)
    out = jax.block_until_ready(reg(factors))
    assert jnp.allclose(out, ref, rtol=5e-5, atol=1e-6), (out, ref)

    # 2) Forced small tile: multi-tile grid, 2-way split axis, masked edge tile.
    out_tiled = jax.block_until_ready(
        (weight * 0.5) * _sum_of_squares(factors, min_pallas_bytes=0, tm=256) / B
    )
    assert jnp.allclose(out_tiled, ref, rtol=5e-5, atol=1e-6), (out_tiled, ref)

    # 3) Mixed shapes, rank not a multiple of 128: lane-dense flatten + jnp tail path.
    odd = jax.random.normal(k4, (97, 40), dtype=jnp.float32)
    mixed = (lhs, odd)
    ref_mixed = _reference_l2(weight, mixed)
    out_mixed = jax.block_until_ready(L2(weight, min_pallas_bytes=0)(mixed))
    assert jnp.allclose(out_mixed, ref_mixed, rtol=5e-5, atol=1e-6), (out_mixed, ref_mixed)

    # 4) Default threshold: small inputs bypass Pallas on purpose (XLA fused reduce).
    out_default = jax.block_until_ready(L2(weight)(factors))
    assert jnp.allclose(out_default, ref, rtol=5e-5, atol=1e-6), (out_default, ref)

    print("KERNEL_OK")
</pallas_src>

<mosaic_0001>
module attributes {stable_mosaic.version = 11 : i64} {
  func.func @kernel(%arg0: i32, %arg1: i32, %arg2: memref<1000x128xf32, #tpu.memory_space<vmem>>, %arg3: memref<8x128xf32, #tpu.memory_space<vmem>>, %arg4: memref<1000x128xf32, #tpu.memory_space<vmem>>) attributes {dimension_semantics = [#tpu.dimension_semantics<parallel>, #tpu.dimension_semantics<arbitrary>], iteration_bounds = array<i64: 1, 1>, scalar_prefetch = 0 : i64, scratch_operands = 1 : i64, tpu.core_type = #tpu.core_type<tc>, window_params = [{transform_indices = @transform_0, window_bounds = array<i64: 1000, 128>}, {transform_indices = @transform_1, window_bounds = array<i64: 8, 128>}]} {
    %c0_i32 = arith.constant 0 : i32
    %0 = arith.cmpi eq, %arg1, %c0_i32 : i32
    %1 = arith.extui %0 : i1 to i32
    %c0_i32_0 = arith.constant 0 : i32
    %2 = arith.cmpi ne, %1, %c0_i32_0 : i32
    scf.if %2 {
      %cst = arith.constant 0.000000e+00 : f32
      %11 = vector.broadcast %cst : f32 to vector<1000x128xf32>
      %c0_8 = arith.constant 0 : index
      %c0_9 = arith.constant 0 : index
      %12 = vector.load %arg4[%c0_8, %c0_9] : memref<1000x128xf32, #tpu.memory_space<vmem>>, vector<1000x128xf32>
      tpu.vector_store %arg4[%c0_8, %c0_9], %11 {strides = array<i32>} : memref<1000x128xf32, #tpu.memory_space<vmem>>, vector<1000x128xf32>,
    } else {
    }
    %c0 = arith.constant 0 : index
    %c0_1 = arith.constant 0 : index
    %3 = vector.load %arg2[%c0, %c0_1] : memref<1000x128xf32, #tpu.memory_space<vmem>>, vector<1000x128xf32>
    %c0_2 = arith.constant 0 : index
    %c0_3 = arith.constant 0 : index
    %4 = vector.load %arg4[%c0_2, %c0_3] : memref<1000x128xf32, #tpu.memory_space<vmem>>, vector<1000x128xf32>
    %5 = arith.mulf %3, %3 : vector<1000x128xf32>
    %6 = arith.addf %4, %5 : vector<1000x128xf32>
    %c0_4 = arith.constant 0 : index
    %c0_5 = arith.constant 0 : index
    %7 = vector.load %arg4[%c0_4, %c0_5] : memref<1000x128xf32, #tpu.memory_space<vmem>>, vector<1000x128xf32>
    tpu.vector_store %arg4[%c0_4, %c0_5], %6 {strides = array<i32>} : memref<1000x128xf32, #tpu.memory_space<vmem>>, vector<1000x128xf32>,
    %c0_i32_6 = arith.constant 0 : i32
    %8 = arith.cmpi eq, %arg1, %c0_i32_6 : i32
    %9 = arith.extui %8 : i1 to i32
    %c0_i32_7 = arith.constant 0 : i32
    %10 = arith.cmpi ne, %9, %c0_i32_7 : i32
    scf.if %10 {
      %cst = arith.constant 0.000000e+00 : f32
      %11 = vector.broadcast %cst : f32 to vector<8x128xf32>
      %c0_8 = arith.constant 0 : index
      %c0_9 = arith.constant 0 : index
      %12 = vector.load %arg4[%c0_8, %c0_9] : memref<1000x128xf32, #tpu.memory_space<vmem>>, vector<1000x128xf32>
      %13 = vector.shape_cast %12 : vector<1000x128xf32> to vector<1x1000x128xf32>
      %cst_10 = arith.constant dense<0.000000e+00> : vector<1xf32>
      %14 = vector.multi_reduction <add>, %13, %cst_10 [1, 2] : vector<1x1000x128xf32> to vector<1xf32>
      %15 = vector.shape_cast %14 : vector<1xf32> to vector<1x1x1xf32>
      %16 = vector.extract %15[0, 0, 0] : f32 from vector<1x1x1xf32>
      %17 = vector.broadcast %16 : f32 to vector<8x128xf32>
      %18 = arith.addf %11, %17 : vector<8x128xf32>
      %c0_11 = arith.constant 0 : index
      %c0_12 = arith.constant 0 : index
      %19 = vector.load %arg3[%c0_11, %c0_12] : memref<8x128xf32, #tpu.memory_space<vmem>>, vector<8x128xf32>
      tpu.vector_store %arg3[%c0_11, %c0_12], %18 {strides = array<i32>} : memref<8x128xf32, #tpu.memory_space<vmem>>, vector<8x128xf32>,
    } else {
    }
    return
  }
  func.func @transform_0(%arg0: i32, %arg1: i32) -> (i32, i32) {
    %c1_i32 = arith.constant 1 : i32
    %0 = arith.muli %arg0, %c1_i32 : i32
    %1 = arith.addi %0, %arg1 : i32
    %c0_i32 = arith.constant 0 : i32
    %2 = arith.minsi %1, %c0_i32 : i32
    %c0_i32_0 = arith.constant 0 : i32
    %c0_i32_1 = arith.constant 0 : i32
    return %2, %c0_i32_0 : i32, i32
  }
  func.func @transform_1(%arg0: i32, %arg1: i32) -> (i32, i32) {
    %c0_i32 = arith.constant 0 : i32
    %c0_i32_0 = arith.constant 0 : i32
    return %arg0, %c0_i32 : i32, i32
  }
}

</mosaic_0001>

<llo_original>
// kernel: tpu_custom_call.1
$region0: #{tpu_custom_call.1}
  #allocation0 [shape = 'u32[]', space=smem, size = 0x4, offset = 0x4, fixed_abs, tag = 'smem constant byte address 0x4 - core index']
  #allocation1 [shape = 'u32[144,128]{1,0:T(1,128)}', space=vmem, size = 0x12000, scoped, tag = 'internal scratch']
  #allocation2 [shape = 'f32[1000,128]{1,0:T(8,128)}', space=vmem, size = 0x7d000, scoped, tag = 'scratch operand']
  %s0 = inlined_call_operand.hbm [shape: f32[1000,128], index: 0, kind: input, shape index: {}]
  %s1 = inlined_call_operand.hbm [shape: f32[8,128], index: 1, kind: output, shape index: {}]
  %s2 = sld [smem:[#allocation0]]
  $region26: #{tpu_custom_call.1} parent=0
    _
  %s4 = ssub.s32 1, %s2
  %s5 = scalar_select 0, %s4, %s2
  $region1: #{tpu_custom_call.1} parent=0
    #allocation3 [shape = 'u8[512000]{0}', space=vmem, size = 0x7d000, scoped, tag = 'input window, operand 0, single buffered']
    #allocation4 [shape = 's32[1]{0}', space=sflag, size = 0x4, scoped, tag = 'scoped memory for tpu_custom_call.1']
    #allocation5 [shape = 's32[1]{0}', space=sflag, size = 0x4, scoped, tag = 'scoped memory for tpu_custom_call.1']
    #allocation6 [shape = 'u8[4096]{0}', space=vmem, size = 0x1000, scoped, tag = 'output window, operand 0, single buffered']
    %6 = vsyncpa [#allocation4], 0
    %7 = vsyncpa [#allocation5], 0
    // Predicated region
    $region2: #{tpu_custom_call.1} parent=1 // pred_check
      _
    $region3: #{tpu_custom_call.1} parent=1 // pred_check_branch
      %9 = sbr.rel (0) target = $region5
    $region4: #{tpu_custom_call.1} parent=1 // pred_region
      %s10 = sadd.s32 0, 0
      %p11 = scmp.lt.s32.totalorder %s10, 0
      %s12 = scalar_select %p11, %s10, 0
      %s13 = smul.u32 125, %s12
      %s15 = ssub.s32 16000, 16000
      %16 = vsyncadd [#allocation4], %s15
      %s17 = smul.addr %s13, 128
      %s18 = scalar_lea.hbm %s0, %s17
      %s19 = sshll.u32 [#allocation3], 4
      %s20 = int_to_ptr.vmem [resolvable:$true] %s19
      %25 = dma.hbm_to_vmem [thread:$0]  %s18, 16000, %s20, [#allocation4], 128, 128, 8
    $region5: #{tpu_custom_call.1} parent=1 // pred_fallthru
      _
    // Predicated region
    $region6: #{tpu_custom_call.1} parent=1 // pred_check
      _
    $region7: #{tpu_custom_call.1} parent=1 // pred_check_branch
      %27 = sbr.rel (0) target = $region9
    $region8: #{tpu_custom_call.1} parent=1 // pred_region
      %28 = dma.done [#allocation4], 16000
    $region9: #{tpu_custom_call.1} parent=1 // pred_fallthru
      _
    %s29 = sadd.s32 0, 0
    %p30 = scmp.lt.s32.totalorder %s29, 0
    %s31 = scalar_select %p30, %s29, 0
    %s32 = smul.u32 125, %s31
    %p33 = scmp.eq.s32.totalorder 0, 0
    // Predicated region
    $region10: #{tpu_custom_call.1} parent=1 // pred_check
      %p34 = pneg %p33
    $region11: #{tpu_custom_call.1} parent=1 // pred_check_branch
      %36 = sbr.rel (%p34) target = $region13
    $region12: #{tpu_custom_call.1} parent=1 // pred_region
      %37 = vst [vmem:[#allocation2] sm:$0xff] 0.0
      %38 = vst [vmem:[#allocation2 + $0x8] sm:$0xff] 0.0
      %39 = vst [vmem:[#allocation2 + $0x10] sm:$0xff] 0.0
      %40 = vst [vmem:[#allocation2 + $0x18] sm:$0xff] 0.0
      %41 = vst [vmem:[#allocation2 + $0x20] sm:$0xff] 0.0
      %42 = vst [vmem:[#allocation2 + $0x28] sm:$0xff] 0.0
      %43 = vst [vmem:[#allocation2 + $0x30] sm:$0xff] 0.0
      %44 = vst [vmem:[#allocation2 + $0x38] sm:$0xff] 0.0
      %45 = vst [vmem:[#allocation2 + $0x40] sm:$0xff] 0.0
      %46 = vst [vmem:[#allocation2 + $0x48] sm:$0xff] 0.0
      %47 = vst [vmem:[#allocation2 + $0x50] sm:$0xff] 0.0
      %48 = vst [vmem:[#allocation2 + $0x58] sm:$0xff] 0.0
      %49 = vst [vmem:[#allocation2 + $0x60] sm:$0xff] 0.0
      %50 = vst [vmem:[#allocation2 + $0x68] sm:$0xff] 0.0
      %51 = vst [vmem:[#allocation2 + $0x70] sm:$0xff] 0.0
      %52 = vst [vmem:[#allocation2 + $0x78] sm:$0xff] 0.0
      %53 = vst [vmem:[#allocation2 + $0x80] sm:$0xff] 0.0
      %54 = vst [vmem:[#allocation2 + $0x88] sm:$0xff] 0.0
      %55 = vst [vmem:[#allocation2 + $0x90] sm:$0xff] 0.0
      %56 = vst [vmem:[#allocation2 + $0x98] sm:$0xff] 0.0
      %57 = vst [vmem:[#allocation2 + $0xa0] sm:$0xff] 0.0
      %58 = vst [vmem:[#allocation2 + $0xa8] sm:$0xff] 0.0
      %59 = vst [vmem:[#allocation2 + $0xb0] sm:$0xff] 0.0
      %60 = vst [vmem:[#allocation2 + $0xb8] sm:$0xff] 0.0
      %61 = vst [vmem:[#allocation2 + $0xc0] sm:$0xff] 0.0
      %62 = vst [vmem:[#allocation2 + $0xc8] sm:$0xff] 0.0
      %63 = vst [vmem:[#allocation2 + $0xd0] sm:$0xff] 0.0
      %64 = vst [vmem:[#allocation2 + $0xd8] sm:$0xff] 0.0
      %65 = vst [vmem:[#allocation2 + $0xe0] sm:$0xff] 0.0
      %66 = vst [vmem:[#allocation2 + $0xe8] sm:$0xff] 0.0
      %67 = vst [vmem:[#allocation2 + $0xf0] sm:$0xff] 0.0
      %68 = vst [vmem:[#allocation2 + $0xf8] sm:$0xff] 0.0
      %69 = vst [vmem:[#allocation2 + $0x100] sm:$0xff] 0.0
      %70 = vst [vmem:[#allocation2 + $0x108] sm:$0xff] 0.0
      %71 = vst [vmem:[#allocation2 + $0x110] sm:$0xff] 0.0
      %72 = vst [vmem:[#allocation2 + $0x118] sm:$0xff] 0.0
      %73 = vst [vmem:[#allocation2 + $0x120] sm:$0xff] 0.0
      %74 = vst [vmem:[#allocation2 + $0x128] sm:$0xff] 0.0
      %75 = vst [vmem:[#allocation2 + $0x130] sm:$0xff] 0.0
      %76 = vst [vmem:[#allocation2 + $0x138] sm:$0xff] 0.0
      %77 = vst [vmem:[#allocation2 + $0x140] sm:$0xff] 0.0
      %78 = vst [vmem:[#allocation2 + $0x148] sm:$0xff] 0.0
      %79 = vst [vmem:[#allocation2 + $0x150] sm:$0xff] 0.0
      %80 = vst [vmem:[#allocation2 + $0x158] sm:$0xff] 0.0
      %81 = vst [vmem:[#allocation2 + $0x160] sm:$0xff] 0.0
      %82 = vst [vmem:[#allocation2 + $0x168] sm:$0xff] 0.0
      %83 = vst [vmem:[#allocation2 + $0x170] sm:$0xff] 0.0
      %84 = vst [vmem:[#allocation2 + $0x178] sm:$0xff] 0.0
      %85 = vst [vmem:[#allocation2 + $0x180] sm:$0xff] 0.0
      %86 = vst [vmem:[#allocation2 + $0x188] sm:$0xff] 0.0
      %87 = vst [vmem:[#allocation2 + $0x190] sm:$0xff] 0.0
      %88 = vst [vmem:[#allocation2 + $0x198] sm:$0xff] 0.0
      %89 = vst [vmem:[#allocation2 + $0x1a0] sm:$0xff] 0.0
      %90 = vst [vmem:[#allocation2 + $0x1a8] sm:$0xff] 0.0
      %91 = vst [vmem:[#allocation2 + $0x1b0] sm:$0xff] 0.0
      %92 = vst [vmem:[#allocation2 + $0x1b8] sm:$0xff] 0.0
      %93 = vst [vmem:[#allocation2 + $0x1c0] sm:$0xff] 0.0
      %94 = vst [vmem:[#allocation2 + $0x1c8] sm:$0xff] 0.0
      %95 = vst [vmem:[#allocation2 + $0x1d0] sm:$0xff] 0.0
      %96 = vst [vmem:[#allocation2 + $0x1d8] sm:$0xff] 0.0
      %97 = vst [vmem:[#allocation2 + $0x1e0] sm:$0xff] 0.0
      %98 = vst [vmem:[#allocation2 + $0x1e8] sm:$0xff] 0.0
      %99 = vst [vmem:[#allocation2 + $0x1f0] sm:$0xff] 0.0
      %100 = vst [vmem:[#allocation2 + $0x1f8] sm:$0xff] 0.0
      %101 = vst [vmem:[#allocation2 + $0x200] sm:$0xff] 0.0
      %102 = vst [vmem:[#allocation2 + $0x208] sm:$0xff] 0.0
      %103 = vst [vmem:[#allocation2 + $0x210] sm:$0xff] 0.0
      %104 = vst [vmem:[#allocation2 + $0x218] sm:$0xff] 0.0
      %105 = vst [vmem:[#allocation2 + $0x220] sm:$0xff] 0.0
      %106 = vst [vmem:[#allocation2 + $0x228] sm:$0xff] 0.0
      %107 = vst [vmem:[#allocation2 + $0x230] sm:$0xff] 0.0
      %108 = vst [vmem:[#allocation2 + $0x238] sm:$0xff] 0.0
      %109 = vst [vmem:[#allocation2 + $0x240] sm:$0xff] 0.0
      %110 = vst [vmem:[#allocation2 + $0x248] sm:$0xff] 0.0
      %111 = vst [vmem:[#allocation2 + $0x250] sm:$0xff] 0.0
      %112 = vst [vmem:[#allocation2 + $0x258] sm:$0xff] 0.0
      %113 = vst [vmem:[#allocation2 + $0x260] sm:$0xff] 0.0
      %114 = vst [vmem:[#allocation2 + $0x268] sm:$0xff] 0.0
      %115 = vst [vmem:[#allocation2 + $0x270] sm:$0xff] 0.0
      %116 = vst [vmem:[#allocation2 + $0x278] sm:$0xff] 0.0
      %117 = vst [vmem:[#allocation2 + $0x280] sm:$0xff] 0.0
      %118 = vst [vmem:[#allocation2 + $0x288] sm:$0xff] 0.0
      %119 = vst [vmem:[#allocation2 + $0x290] sm:$0xff] 0.0
      %120 = vst [vmem:[#allocation2 + $0x298] sm:$0xff] 0.0
      %121 = vst [vmem:[#allocation2 + $0x2a0] sm:$0xff] 0.0
      %122 = vst [vmem:[#allocation2 + $0x2a8] sm:$0xff] 0.0
      %123 = vst [vmem:[#allocation2 + $0x2b0] sm:$0xff] 0.0
      %124 = vst [vmem:[#allocation2 + $0x2b8] sm:$0xff] 0.0
      %125 = vst [vmem:[#allocation2 + $0x2c0] sm:$0xff] 0.0
      %126 = vst [vmem:[#allocation2 + $0x2c8] sm:$0xff] 0.0
      %127 = vst [vmem:[#allocation2 + $0x2d0] sm:$0xff] 0.0
      %128 = vst [vmem:[#allocation2 + $0x2d8] sm:$0xff] 0.0
      %129 = vst [vmem:[#allocation2 + $0x2e0] sm:$0xff] 0.0
      %130 = vst [vmem:[#allocation2 + $0x2e8] sm:$0xff] 0.0
      %131 = vst [vmem:[#allocation2 + $0x2f0] sm:$0xff] 0.0
      %132 = vst [vmem:[#allocation2 + $0x2f8] sm:$0xff] 0.0
      %133 = vst [vmem:[#allocation2 + $0x300] sm:$0xff] 0.0
      %134 = vst [vmem:[#allocation2 + $0x308] sm:$0xff] 0.0
      %135 = vst [vmem:[#allocation2 + $0x310] sm:$0xff] 0.0
      %136 = vst [vmem:[#allocation2 + $0x318] sm:$0xff] 0.0
      %137 = vst [vmem:[#allocation2 + $0x320] sm:$0xff] 0.0
      %138 = vst [vmem:[#allocation2 + $0x328] sm:$0xff] 0.0
      %139 = vst [vmem:[#allocation2 + $0x330] sm:$0xff] 0.0
      %140 = vst [vmem:[#allocation2 + $0x338] sm:$0xff] 0.0
      %141 = vst [vmem:[#allocation2 + $0x340] sm:$0xff] 0.0
      %142 = vst [vmem:[#allocation2 + $0x348] sm:$0xff] 0.0
      %143 = vst [vmem:[#allocation2 + $0x350] sm:$0xff] 0.0
      %144 = vst [vmem:[#allocation2 + $0x358] sm:$0xff] 0.0
      %145 = vst [vmem:[#allocation2 + $0x360] sm:$0xff] 0.0
      %146 = vst [vmem:[#allocation2 + $0x368] sm:$0xff] 0.0
      %147 = vst [vmem:[#allocation2 + $0x370] sm:$0xff] 0.0
      %148 = vst [vmem:[#allocation2 + $0x378] sm:$0xff] 0.0
      %149 = vst [vmem:[#allocation2 + $0x380] sm:$0xff] 0.0
      %150 = vst [vmem:[#allocation2 + $0x388] sm:$0xff] 0.0
      %151 = vst [vmem:[#allocation2 + $0x390] sm:$0xff] 0.0
      %152 = vst [vmem:[#allocation2 + $0x398] sm:$0xff] 0.0
      %153 = vst [vmem:[#allocation2 + $0x3a0] sm:$0xff] 0.0
      %154 = vst [vmem:[#allocation2 + $0x3a8] sm:$0xff] 0.0
      %155 = vst [vmem:[#allocation2 + $0x3b0] sm:$0xff] 0.0
      %156 = vst [vmem:[#allocation2 + $0x3b8] sm:$0xff] 0.0
      %157 = vst [vmem:[#allocation2 + $0x3c0] sm:$0xff] 0.0
      %158 = vst [vmem:[#allocation2 + $0x3c8] sm:$0xff] 0.0
      %159 = vst [vmem:[#allocation2 + $0x3d0] sm:$0xff] 0.0
      %160 = vst [vmem:[#allocation2 + $0x3d8] sm:$0xff] 0.0
      %161 = vst [vmem:[#allocation2 + $0x3e0] sm:$0xff] 0.0
    $region13: #{tpu_custom_call.1} parent=1 // pred_fallthru
      _
    %v162 = vld [vmem:[#allocation3] sm:$0xff]
    %v163 = vld [vmem:[#allocation3 + $0x8] sm:$0xff]
    %v164 = vld [vmem:[#allocation3 + $0x10] sm:$0xff]
    %v165 = vld [vmem:[#allocation3 + $0x18] sm:$0xff]
    %v166 = vld [vmem:[#allocation3 + $0x20] sm:$0xff]
    %v167 = vld [vmem:[#allocation3 + $0x28] sm:$0xff]
    %v168 = vld [vmem:[#allocation3 + $0x30] sm:$0xff]
    %v169 = vld [vmem:[#allocation3 + $0x38] sm:$0xff]
    %v170 = vld [vmem:[#allocation3 + $0x40] sm:$0xff]
    %v171 = vld [vmem:[#allocation3 + $0x48] sm:$0xff]
    %v172 = vld [vmem:[#allocation3 + $0x50] sm:$0xff]
    %v173 = vld [vmem:[#allocation3 + $0x58] sm:$0xff]
    %v174 = vld [vmem:[#allocation3 + $0x60] sm:$0xff]
    %v175 = vld [vmem:[#allocation3 + $0x68] sm:$0xff]
    %v176 = vld [vmem:[#allocation3 + $0x70] sm:$0xff]
    %v177 = vld [vmem:[#allocation3 + $0x78] sm:$0xff]
    %v178 = vld [vmem:[#allocation3 + $0x80] sm:$0xff]
    %v179 = vld [vmem:[#allocation3 + $0x88] sm:$0xff]
    %v180 = vld [vmem:[#allocation3 + $0x90] sm:$0xff]
    %v181 = vld [vmem:[#allocation3 + $0x98] sm:$0xff]
    %v182 = vld [vmem:[#allocation3 + $0xa0] sm:$0xff]
    %v183 = vld [vmem:[#allocation3 + $0xa8] sm:$0xff]
    %v184 = vld [vmem:[#allocation3 + $0xb0] sm:$0xff]
    %v185 = vld [vmem:[#allocation3 + $0xb8] sm:$0xff]
    %v186 = vld [vmem:[#allocation3 + $0xc0] sm:$0xff]
    %v187 = vld [vmem:[#allocation3 + $0xc8] sm:$0xff]
    %v188 = vld [vmem:[#allocation3 + $0xd0] sm:$0xff]
    %v189 = vld [vmem:[#allocation3 + $0xd8] sm:$0xff]
    %v190 = vld [vmem:[#allocation3 + $0xe0] sm:$0xff]
    %v191 = vld [vmem:[#allocation3 + $0xe8] sm:$0xff]
    %v192 = vld [vmem:[#allocation3 + $0xf0] sm:$0xff]
    %v193 = vld [vmem:[#allocation3 + $0xf8] sm:$0xff]
    %v194 = vld [vmem:[#allocation3 + $0x100] sm:$0xff]
    %v195 = vld [vmem:[#allocation3 + $0x108] sm:$0xff]
    %v196 = vld [vmem:[#allocation3 + $0x110] sm:$0xff]
    %v197 = vld [vmem:[#allocation3 + $0x118] sm:$0xff]
    %v198 = vld [vmem:[#allocation3 + $0x120] sm:$0xff]
    %v199 = vld [vmem:[#allocation3 + $0x128] sm:$0xff]
    %v200 = vld [vmem:[#allocation3 + $0x130] sm:$0xff]
    %v201 = vld [vmem:[#allocation3 + $0x138] sm:$0xff]
    %v202 = vld [vmem:[#allocation3 + $0x140] sm:$0xff]
    %v203 = vld [vmem:[#allocation3 + $0x148] sm:$0xff]
    %v204 = vld [vmem:[#allocation3 + $0x150] sm:$0xff]
    %v205 = vld [vmem:[#allocation3 + $0x158] sm:$0xff]
    %v206 = vld [vmem:[#allocation3 + $0x160] sm:$0xff]
    %v207 = vld [vmem:[#allocation3 + $0x168] sm:$0xff]
    %v208 = vld [vmem:[#allocation3 + $0x170] sm:$0xff]
    %v209 = vld [vmem:[#allocation3 + $0x178] sm:$0xff]
    %v210 = vld [vmem:[#allocation3 + $0x180] sm:$0xff]
    %v211 = vld [vmem:[#allocation3 + $0x188] sm:$0xff]
    %v212 = vld [vmem:[#allocation3 + $0x190] sm:$0xff]
    %v213 = vld [vmem:[#allocation3 + $0x198] sm:$0xff]
    %v214 = vld [vmem:[#allocation3 + $0x1a0] sm:$0xff]
    %v215 = vld [vmem:[#allocation3 + $0x1a8] sm:$0xff]
    %v216 = vld [vmem:[#allocation3 + $0x1b0] sm:$0xff]
    %v217 = vld [vmem:[#allocation3 + $0x1b8] sm:$0xff]
    %v218 = vld [vmem:[#allocation3 + $0x1c0] sm:$0xff]
    %v219 = vld [vmem:[#allocation3 + $0x1c8] sm:$0xff]
    %v220 = vld [vmem:[#allocation3 + $0x1d0] sm:$0xff]
    %v221 = vld [vmem:[#allocation3 + $0x1d8] sm:$0xff]
    %v222 = vld [vmem:[#allocation3 + $0x1e0] sm:$0xff]
    %v223 = vld [vmem:[#allocation3 + $0x1e8] sm:$0xff]
    %v224 = vld [vmem:[#allocation3 + $0x1f0] sm:$0xff]
    %v225 = vld [vmem:[#allocation3 + $0x1f8] sm:$0xff]
    %v226 = vld [vmem:[#allocation3 + $0x200] sm:$0xff]
    %v227 = vld [vmem:[#allocation3 + $0x208] sm:$0xff]
    %v228 = vld [vmem:[#allocation3 + $0x210] sm:$0xff]
    %v229 = vld [vmem:[#allocation3 + $0x218] sm:$0xff]
    %v230 = vld [vmem:[#allocation3 + $0x220] sm:$0xff]
    %v231 = vld [vmem:[#allocation3 + $0x228] sm:$0xff]
    %v232 = vld [vmem:[#allocation3 + $0x230] sm:$0xff]
    %v233 = vld [vmem:[#allocation3 + $0x238] sm:$0xff]
    %v234 = vld [vmem:[#allocation3 + $0x240] sm:$0xff]
    %v235 = vld [vmem:[#allocation3 + $0x248] sm:$0xff]
    %v236 = vld [vmem:[#allocation3 + $0x250] sm:$0xff]
    %v237 = vld [vmem:[#allocation3 + $0x258] sm:$0xff]
    %v238 = vld [vmem:[#allocation3 + $0x260] sm:$0xff]
    %v239 = vld [vmem:[#allocation3 + $0x268] sm:$0xff]
    %v240 = vld [vmem:[#allocation3 + $0x270] sm:$0xff]
    %v241 = vld [vmem:[#allocation3 + $0x278] sm:$0xff]
    %v242 = vld [vmem:[#allocation3 + $0x280] sm:$0xff]
    %v243 = vld [vmem:[#allocation3 + $0x288] sm:$0xff]
    %v244 = vld [vmem:[#allocation3 + $0x290] sm:$0xff]
    %v245 = vld [vmem:[#allocation3 + $0x298] sm:$0xff]
    %v246 = vld [vmem:[#allocation3 + $0x2a0] sm:$0xff]
    %v247 = vld [vmem:[#allocation3 + $0x2a8] sm:$0xff]
    %v248 = vld [vmem:[#allocation3 + $0x2b0] sm:$0xff]
    %v249 = vld [vmem:[#allocation3 + $0x2b8] sm:$0xff]
    %v250 = vld [vmem:[#allocation3 + $0x2c0] sm:$0xff]
    %v251 = vld [vmem:[#allocation3 + $0x2c8] sm:$0xff]
    %v252 = vld [vmem:[#allocation3 + $0x2d0] sm:$0xff]
    %v253 = vld [vmem:[#allocation3 + $0x2d8] sm:$0xff]
    %v254 = vld [vmem:[#allocation3 + $0x2e0] sm:$0xff]
    %v255 = vld [vmem:[#allocation3 + $0x2e8] sm:$0xff]
    %v256 = vld [vmem:[#allocation3 + $0x2f0] sm:$0xff]
    %v257 = vld [vmem:[#allocation3 + $0x2f8] sm:$0xff]
    %v258 = vld [vmem:[#allocation3 + $0x300] sm:$0xff]
    %v259 = vld [vmem:[#allocation3 + $0x308] sm:$0xff]
    %v260 = vld [vmem:[#allocation3 + $0x310] sm:$0xff]
    %v261 = vld [vmem:[#allocation3 + $0x318] sm:$0xff]
    %v262 = vld [vmem:[#allocation3 + $0x320] sm:$0xff]
    %v263 = vld [vmem:[#allocation3 + $0x328] sm:$0xff]
    %v264 = vld [vmem:[#allocation3 + $0x330] sm:$0xff]
    %v265 = vld [vmem:[#allocation3 + $0x338] sm:$0xff]
    %v266 = vld [vmem:[#allocation3 + $0x340] sm:$0xff]
    %v267 = vld [vmem:[#allocation3 + $0x348] sm:$0xff]
    %v268 = vld [vmem:[#allocation3 + $0x350] sm:$0xff]
    %v269 = vld [vmem:[#allocation3 + $0x358] sm:$0xff]
    %v270 = vld [vmem:[#allocation3 + $0x360] sm:$0xff]
    %v271 = vld [vmem:[#allocation3 + $0x368] sm:$0xff]
    %v272 = vld [vmem:[#allocation3 + $0x370] sm:$0xff]
    %v273 = vld [vmem:[#allocation3 + $0x378] sm:$0xff]
    %v274 = vld [vmem:[#allocation3 + $0x380] sm:$0xff]
    %v275 = vld [vmem:[#allocation3 + $0x388] sm:$0xff]
    %v276 = vld [vmem:[#allocation3 + $0x390] sm:$0xff]
    %v277 = vld [vmem:[#allocation3 + $0x398] sm:$0xff]
    %v278 = vld [vmem:[#allocation3 + $0x3a0] sm:$0xff]
    %v279 = vld [vmem:[#allocation3 + $0x3a8] sm:$0xff]
    %v280 = vld [vmem:[#allocation3 + $0x3b0] sm:$0xff]
    %v281 = vld [vmem:[#allocation3 + $0x3b8] sm:$0xff]
    %v282 = vld [vmem:[#allocation3 + $0x3c0] sm:$0xff]
    %v283 = vld [vmem:[#allocation3 + $0x3c8] sm:$0xff]
    %v284 = vld [vmem:[#allocation3 + $0x3d0] sm:$0xff]
    %v285 = vld [vmem:[#allocation3 + $0x3d8] sm:$0xff]
    %v286 = vld [vmem:[#allocation3 + $0x3e0] sm:$0xff]
    %v287 = vld [vmem:[#allocation2] sm:$0xff]
    %v288 = vld [vmem:[#allocation2 + $0x8] sm:$0xff]
    %v289 = vld [vmem:[#allocation2 + $0x10] sm:$0xff]
    %v290 = vld [vmem:[#allocation2 + $0x18] sm:$0xff]
    %v291 = vld [vmem:[#allocation2 + $0x20] sm:$0xff]
    %v292 = vld [vmem:[#allocation2 + $0x28] sm:$0xff]
    %v293 = vld [vmem:[#allocation2 + $0x30] sm:$0xff]
    %v294 = vld [vmem:[#allocation2 + $0x38] sm:$0xff]
    %v295 = vld [vmem:[#allocation2 + $0x40] sm:$0xff]
    %v296 = vld [vmem:[#allocation2 + $0x48] sm:$0xff]
    %v297 = vld [vmem:[#allocation2 + $0x50] sm:$0xff]
    %v298 = vld [vmem:[#allocation2 + $0x58] sm:$0xff]
    %v299 = vld [vmem:[#allocation2 + $0x60] sm:$0xff]
    %v300 = vld [vmem:[#allocation2 + $0x68] sm:$0xff]
    %v301 = vld [vmem:[#allocation2 + $0x70] sm:$0xff]
    %v302 = vld [vmem:[#allocation2 + $0x78] sm:$0xff]
    %v303 = vld [vmem:[#allocation2 + $0x80] sm:$0xff]
    %v304 = vld [vmem:[#allocation2 + $0x88] sm:$0xff]
    %v305 = vld [vmem:[#allocation2 + $0x90] sm:$0xff]
    %v306 = vld [vmem:[#allocation2 + $0x98] sm:$0xff]
    %v307 = vld [vmem:[#allocation2 + $0xa0] sm:$0xff]
    %v308 = vld [vmem:[#allocation2 + $0xa8] sm:$0xff]
    %v309 = vld [vmem:[#allocation2 + $0xb0] sm:$0xff]
    %v310 = vld [vmem:[#allocation2 + $0xb8] sm:$0xff]
    %v311 = vld [vmem:[#allocation2 + $0xc0] sm:$0xff]
    %v312 = vld [vmem:[#allocation2 + $0xc8] sm:$0xff]
    %v313 = vld [vmem:[#allocation2 + $0xd0] sm:$0xff]
    %v314 = vld [vmem:[#allocation2 + $0xd8] sm:$0xff]
    %v315 = vld [vmem:[#allocation2 + $0xe0] sm:$0xff]
    %v316 = vld [vmem:[#allocation2 + $0xe8] sm:$0xff]
    %v317 = vld [vmem:[#allocation2 + $0xf0] sm:$0xff]
    %v318 = vld [vmem:[#allocation2 + $0xf8] sm:$0xff]
    %v319 = vld [vmem:[#allocation2 + $0x100] sm:$0xff]
    %v320 = vld [vmem:[#allocation2 + $0x108] sm:$0xff]
    %v321 = vld [vmem:[#allocation2 + $0x110] sm:$0xff]
    %v322 = vld [vmem:[#allocation2 + $0x118] sm:$0xff]
    %v323 = vld [vmem:[#allocation2 + $0x120] sm:$0xff]
    %v324 = vld [vmem:[#allocation2 + $0x128] sm:$0xff]
    %v325 = vld [vmem:[#allocation2 + $0x130] sm:$0xff]
    %v326 = vld [vmem:[#allocation2 + $0x138] sm:$0xff]
    %v327 = vld [vmem:[#allocation2 + $0x140] sm:$0xff]
    %v328 = vld [vmem:[#allocation2 + $0x148] sm:$0xff]
    %v329 = vld [vmem:[#allocation2 + $0x150] sm:$0xff]
    %v330 = vld [vmem:[#allocation2 + $0x158] sm:$0xff]
    %v331 = vld [vmem:[#allocation2 + $0x160] sm:$0xff]
    %v332 = vld [vmem:[#allocation2 + $0x168] sm:$0xff]
    %v333 = vld [vmem:[#allocation2 + $0x170] sm:$0xff]
    %v334 = vld [vmem:[#allocation2 + $0x178] sm:$0xff]
    %v335 = vld [vmem:[#allocation2 + $0x180] sm:$0xff]
    %v336 = vld [vmem:[#allocation2 + $0x188] sm:$0xff]
    %v337 = vld [vmem:[#allocation2 + $0x190] sm:$0xff]
    %v338 = vld [vmem:[#allocation2 + $0x198] sm:$0xff]
    %v339 = vld [vmem:[#allocation2 + $0x1a0] sm:$0xff]
    %v340 = vld [vmem:[#allocation2 + $0x1a8] sm:$0xff]
    %v341 = vld [vmem:[#allocation2 + $0x1b0] sm:$0xff]
    %v342 = vld [vmem:[#allocation2 + $0x1b8] sm:$0xff]
    %v343 = vld [vmem:[#allocation2 + $0x1c0] sm:$0xff]
    %v344 = vld [vmem:[#allocation2 + $0x1c8] sm:$0xff]
    %v345 = vld [vmem:[#allocation2 + $0x1d0] sm:$0xff]
    %v346 = vld [vmem:[#allocation2 + $0x1d8] sm:$0xff]
    %v347 = vld [vmem:[#allocation2 + $0x1e0] sm:$0xff]
    %v348 = vld [vmem:[#allocation2 + $0x1e8] sm:$0xff]
    %v349 = vld [vmem:[#allocation2 + $0x1f0] sm:$0xff]
    %v350 = vld [vmem:[#allocation2 + $0x1f8] sm:$0xff]
    %v351 = vld [vmem:[#allocation2 + $0x200] sm:$0xff]
    %v352 = vld [vmem:[#allocation2 + $0x208] sm:$0xff]
    %v353 = vld [vmem:[#allocation2 + $0x210] sm:$0xff]
    %v354 = vld [vmem:[#allocation2 + $0x218] sm:$0xff]
    %v355 = vld [vmem:[#allocation2 + $0x220] sm:$0xff]
    %v356 = vld [vmem:[#allocation2 + $0x228] sm:$0xff]
    %v357 = vld [vmem:[#allocation2 + $0x230] sm:$0xff]
    %v358 = vld [vmem:[#allocation2 + $0x238] sm:$0xff]
    %v359 = vld [vmem:[#allocation2 + $0x240] sm:$0xff]
    %v360 = vld [vmem:[#allocation2 + $0x248] sm:$0xff]
    %v361 = vld [vmem:[#allocation2 + $0x250] sm:$0xff]
    %v362 = vld [vmem:[#allocation2 + $0x258] sm:$0xff]
    %v363 = vld [vmem:[#allocation2 + $0x260] sm:$0xff]
    %v364 = vld [vmem:[#allocation2 + $0x268] sm:$0xff]
    %v365 = vld [vmem:[#allocation2 + $0x270] sm:$0xff]
    %v366 = vld [vmem:[#allocation2 + $0x278] sm:$0xff]
    %v367 = vld [vmem:[#allocation2 + $0x280] sm:$0xff]
    %v368 = vld [vmem:[#allocation2 + $0x288] sm:$0xff]
    %v369 = vld [vmem:[#allocation2 + $0x290] sm:$0xff]
    %v370 = vld [vmem:[#allocation2 + $0x298] sm:$0xff]
    %v371 = vld [vmem:[#allocation2 + $0x2a0] sm:$0xff]
    %v372 = vld [vmem:[#allocation2 + $0x2a8] sm:$0xff]
    %v373 = vld [vmem:[#allocation2 + $0x2b0] sm:$0xff]
    %v374 = vld [vmem:[#allocation2 + $0x2b8] sm:$0xff]
    %v375 = vld [vmem:[#allocation2 + $0x2c0] sm:$0xff]
    %v376 = vld [vmem:[#allocation2 + $0x2c8] sm:$0xff]
    %v377 = vld [vmem:[#allocation2 + $0x2d0] sm:$0xff]
    %v378 = vld [vmem:[#allocation2 + $0x2d8] sm:$0xff]
    %v379 = vld [vmem:[#allocation2 + $0x2e0] sm:$0xff]
    %v380 = vld [vmem:[#allocation2 + $0x2e8] sm:$0xff]
    %v381 = vld [vmem:[#allocation2 + $0x2f0] sm:$0xff]
    %v382 = vld [vmem:[#allocation2 + $0x2f8] sm:$0xff]
    %v383 = vld [vmem:[#allocation2 + $0x300] sm:$0xff]
    %v384 = vld [vmem:[#allocation2 + $0x308] sm:$0xff]
    %v385 = vld [vmem:[#allocation2 + $0x310] sm:$0xff]
    %v386 = vld [vmem:[#allocation2 + $0x318] sm:$0xff]
    %v387 = vld [vmem:[#allocation2 + $0x320] sm:$0xff]
    %v388 = vld [vmem:[#allocation2 + $0x328] sm:$0xff]
    %v389 = vld [vmem:[#allocation2 + $0x330] sm:$0xff]
    %v390 = vld [vmem:[#allocation2 + $0x338] sm:$0xff]
    %v391 = vld [vmem:[#allocation2 + $0x340] sm:$0xff]
    %v392 = vld [vmem:[#allocation2 + $0x348] sm:$0xff]
    %v393 = vld [vmem:[#allocation2 + $0x350] sm:$0xff]
    %v394 = vld [vmem:[#allocation2 + $0x358] sm:$0xff]
    %v395 = vld [vmem:[#allocation2 + $0x360] sm:$0xff]
    %v396 = vld [vmem:[#allocation2 + $0x368] sm:$0xff]
    %v397 = vld [vmem:[#allocation2 + $0x370] sm:$0xff]
    %v398 = vld [vmem:[#allocation2 + $0x378] sm:$0xff]
    %v399 = vld [vmem:[#allocation2 + $0x380] sm:$0xff]
    %v400 = vld [vmem:[#allocation2 + $0x388] sm:$0xff]
    %v401 = vld [vmem:[#allocation2 + $0x390] sm:$0xff]
    %v402 = vld [vmem:[#allocation2 + $0x398] sm:$0xff]
    %v403 = vld [vmem:[#allocation2 + $0x3a0] sm:$0xff]
    %v404 = vld [vmem:[#allocation2 + $0x3a8] sm:$0xff]
    %v405 = vld [vmem:[#allocation2 + $0x3b0] sm:$0xff]
    %v406 = vld [vmem:[#allocation2 + $0x3b8] sm:$0xff]
    %v407 = vld [vmem:[#allocation2 + $0x3c0] sm:$0xff]
    %v408 = vld [vmem:[#allocation2 + $0x3c8] sm:$0xff]
    %v409 = vld [vmem:[#allocation2 + $0x3d0] sm:$0xff]
    %v410 = vld [vmem:[#allocation2 + $0x3d8] sm:$0xff]
    %v411 = vld [vmem:[#allocation2 + $0x3e0] sm:$0xff]
    %v412 = vmul.f32 %v162, %v162
    %v413 = vmul.f32 %v163, %v163
    %v414 = vmul.f32 %v164, %v164
    %v415 = vmul.f32 %v165, %v165
    %v416 = vmul.f32 %v166, %v166
    %v417 = vmul.f32 %v167, %v167
    %v418 = vmul.f32 %v168, %v168
    %v419 = vmul.f32 %v169, %v169
    %v420 = vmul.f32 %v170, %v170
    %v421 = vmul.f32 %v171, %v171
    %v422 = vmul.f32 %v172, %v172
    %v423 = vmul.f32 %v173, %v173
    %v424 = vmul.f32 %v174, %v174
    %v425 = vmul.f32 %v175, %v175
    %v426 = vmul.f32 %v176, %v176
    %v427 = vmul.f32 %v177, %v177
    %v428 = vmul.f32 %v178, %v178
    %v429 = vmul.f32 %v179, %v179
    %v430 = vmul.f32 %v180, %v180
    %v431 = vmul.f32 %v181, %v181
    %v432 = vmul.f32 %v182, %v182
    %v433 = vmul.f32 %v183, %v183
    %v434 = vmul.f32 %v184, %v184
    %v435 = vmul.f32 %v185, %v185
    %v436 = vmul.f32 %v186, %v186
    %v437 = vmul.f32 %v187, %v187
    %v438 = vmul.f32 %v188, %v188
    %v439 = vmul.f32 %v189, %v189
    %v440 = vmul.f32 %v190, %v190
    %v441 = vmul.f32 %v191, %v191
    %v442 = vmul.f32 %v192, %v192
    %v443 = vmul.f32 %v193, %v193
    %v444 = vmul.f32 %v194, %v194
    %v445 = vmul.f32 %v195, %v195
    %v446 = vmul.f32 %v196, %v196
    %v447 = vmul.f32 %v197, %v197
    %v448 = vmul.f32 %v198, %v198
    %v449 = vmul.f32 %v199, %v199
    %v450 = vmul.f32 %v200, %v200
    %v451 = vmul.f32 %v201, %v201
    %v452 = vmul.f32 %v202, %v202
    %v453 = vmul.f32 %v203, %v203
    %v454 = vmul.f32 %v204, %v204
    %v455 = vmul.f32 %v205, %v205
    %v456 = vmul.f32 %v206, %v206
    %v457 = vmul.f32 %v207, %v207
    %v458 = vmul.f32 %v208, %v208
    %v459 = vmul.f32 %v209, %v209
    %v460 = vmul.f32 %v210, %v210
    %v461 = vmul.f32 %v211, %v211
    %v462 = vmul.f32 %v212, %v212
    %v463 = vmul.f32 %v213, %v213
    %v464 = vmul.f32 %v214, %v214
    %v465 = vmul.f32 %v215, %v215
    %v466 = vmul.f32 %v216, %v216
    %v467 = vmul.f32 %v217, %v217
    %v468 = vmul.f32 %v218, %v218
    %v469 = vmul.f32 %v219, %v219
    %v470 = vmul.f32 %v220, %v220
    %v471 = vmul.f32 %v221, %v221
    %v472 = vmul.f32 %v222, %v222
    %v473 = vmul.f32 %v223, %v223
    %v474 = vmul.f32 %v224, %v224
    %v475 = vmul.f32 %v225, %v225
    %v476 = vmul.f32 %v226, %v226
    %v477 = vmul.f32 %v227, %v227
    %v478 = vmul.f32 %v228, %v228
    %v479 = vmul.f32 %v229, %v229
    %v480 = vmul.f32 %v230, %v230
    %v481 = vmul.f32 %v231, %v231
    %v482 = vmul.f32 %v232, %v232
    %v483 = vmul.f32 %v233, %v233
    %v484 = vmul.f32 %v234, %v234
    %v485 = vmul.f32 %v235, %v235
    %v486 = vmul.f32 %v236, %v236
    %v487 = vmul.f32 %v237, %v237
    %v488 = vmul.f32 %v238, %v238
    %v489 = vmul.f32 %v239, %v239
    %v490 = vmul.f32 %v240, %v240
    %v491 = vmul.f32 %v241, %v241
    %v492 = vmul.f32 %v242, %v242
    %v493 = vmul.f32 %v243, %v243
    %v494 = vmul.f32 %v244, %v244
    %v495 = vmul.f32 %v245, %v245
    %v496 = vmul.f32 %v246, %v246
    %v497 = vmul.f32 %v247, %v247
    %v498 = vmul.f32 %v248, %v248
    %v499 = vmul.f32 %v249, %v249
    %v500 = vmul.f32 %v250, %v250
    %v501 = vmul.f32 %v251, %v251
    %v502 = vmul.f32 %v252, %v252
    %v503 = vmul.f32 %v253, %v253
    %v504 = vmul.f32 %v254, %v254
    %v505 = vmul.f32 %v255, %v255
    %v506 = vmul.f32 %v256, %v256
    %v507 = vmul.f32 %v257, %v257
    %v508 = vmul.f32 %v258, %v258
    %v509 = vmul.f32 %v259, %v259
    %v510 = vmul.f32 %v260, %v260
    %v511 = vmul.f32 %v261, %v261
    %v512 = vmul.f32 %v262, %v262
    %v513 = vmul.f32 %v263, %v263
    %v514 = vmul.f32 %v264, %v264
    %v515 = vmul.f32 %v265, %v265
    %v516 = vmul.f32 %v266, %v266
    %v517 = vmul.f32 %v267, %v267
    %v518 = vmul.f32 %v268, %v268
    %v519 = vmul.f32 %v269, %v269
    %v520 = vmul.f32 %v270, %v270
    %v521 = vmul.f32 %v271, %v271
    %v522 = vmul.f32 %v272, %v272
    %v523 = vmul.f32 %v273, %v273
    %v524 = vmul.f32 %v274, %v274
    %v525 = vmul.f32 %v275, %v275
    %v526 = vmul.f32 %v276, %v276
    %v527 = vmul.f32 %v277, %v277
    %v528 = vmul.f32 %v278, %v278
    %v529 = vmul.f32 %v279, %v279
    %v530 = vmul.f32 %v280, %v280
    %v531 = vmul.f32 %v281, %v281
    %v532 = vmul.f32 %v282, %v282
    %v533 = vmul.f32 %v283, %v283
    %v534 = vmul.f32 %v284, %v284
    %v535 = vmul.f32 %v285, %v285
    %v536 = vmul.f32 %v286, %v286
    %v537 = vadd.f32 %v287, %v412
    %v538 = vadd.f32 %v288, %v413
    %v539 = vadd.f32 %v289, %v414
    %v540 = vadd.f32 %v290, %v415
    %v541 = vadd.f32 %v291, %v416
    %v542 = vadd.f32 %v292, %v417
    %v543 = vadd.f32 %v293, %v418
    %v544 = vadd.f32 %v294, %v419
    %v545 = vadd.f32 %v295, %v420
    %v546 = vadd.f32 %v296, %v421
    %v547 = vadd.f32 %v297, %v422
    %v548 = vadd.f32 %v298, %v423
    %v549 = vadd.f32 %v299, %v424
    %v550 = vadd.f32 %v300, %v425
    %v551 = vadd.f32 %v301, %v426
    %v552 = vadd.f32 %v302, %v427
    %v553 = vadd.f32 %v303, %v428
    %v554 = vadd.f32 %v304, %v429
    %v555 = vadd.f32 %v305, %v430
    %v556 = vadd.f32 %v306, %v431
    %v557 = vadd.f32 %v307, %v432
    %v558 = vadd.f32 %v308, %v433
    %v559 = vadd.f32 %v309, %v434
    %v560 = vadd.f32 %v310, %v435
    %v561 = vadd.f32 %v311, %v436
    %v562 = vadd.f32 %v312, %v437
    %v563 = vadd.f32 %v313, %v438
    %v564 = vadd.f32 %v314, %v439
    %v565 = vadd.f32 %v315, %v440
    %v566 = vadd.f32 %v316, %v441
    %v567 = vadd.f32 %v317, %v442
    %v568 = vadd.f32 %v318, %v443
    %v569 = vadd.f32 %v319, %v444
    %v570 = vadd.f32 %v320, %v445
    %v571 = vadd.f32 %v321, %v446
    %v572 = vadd.f32 %v322, %v447
    %v573 = vadd.f32 %v323, %v448
    %v574 = vadd.f32 %v324, %v449
    %v575 = vadd.f32 %v325, %v450
    %v576 = vadd.f32 %v326, %v451
    %v577 = vadd.f32 %v327, %v452
    %v578 = vadd.f32 %v328, %v453
    %v579 = vadd.f32 %v329, %v454
    %v580 = vadd.f32 %v330, %v455
    %v581 = vadd.f32 %v331, %v456
    %v582 = vadd.f32 %v332, %v457
    %v583 = vadd.f32 %v333, %v458
    %v584 = vadd.f32 %v334, %v459
    %v585 = vadd.f32 %v335, %v460
    %v586 = vadd.f32 %v336, %v461
    %v587 = vadd.f32 %v337, %v462
    %v588 = vadd.f32 %v338, %v463
    %v589 = vadd.f32 %v339, %v464
    %v590 = vadd.f32 %v340, %v465
    %v591 = vadd.f32 %v341, %v466
    %v592 = vadd.f32 %v342, %v467
    %v593 = vadd.f32 %v343, %v468
    %v594 = vadd.f32 %v344, %v469
    %v595 = vadd.f32 %v345, %v470
    %v596 = vadd.f32 %v346, %v471
    %v597 = vadd.f32 %v347, %v472
    %v598 = vadd.f32 %v348, %v473
    %v599 = vadd.f32 %v349, %v474
    %v600 = vadd.f32 %v350, %v475
    %v601 = vadd.f32 %v351, %v476
    %v602 = vadd.f32 %v352, %v477
    %v603 = vadd.f32 %v353, %v478
    %v604 = vadd.f32 %v354, %v479
    %v605 = vadd.f32 %v355, %v480
    %v606 = vadd.f32 %v356, %v481
    %v607 = vadd.f32 %v357, %v482
    %v608 = vadd.f32 %v358, %v483
    %v609 = vadd.f32 %v359, %v484
    %v610 = vadd.f32 %v360, %v485
    %v611 = vadd.f32 %v361, %v486
    %v612 = vadd.f32 %v362, %v487
    %v613 = vadd.f32 %v363, %v488
    %v614 = vadd.f32 %v364, %v489
    %v615 = vadd.f32 %v365, %v490
    %v616 = vadd.f32 %v366, %v491
    %v617 = vadd.f32 %v367, %v492
    %v618 = vadd.f32 %v368, %v493
    %v619 = vadd.f32 %v369, %v494
    %v620 = vadd.f32 %v370, %v495
    %v621 = vadd.f32 %v371, %v496
    %v622 = vadd.f32 %v372, %v497
    %v623 = vadd.f32 %v373, %v498
    %v624 = vadd.f32 %v374, %v499
    %v625 = vadd.f32 %v375, %v500
    %v626 = vadd.f32 %v376, %v501
    %v627 = vadd.f32 %v377, %v502
    %v628 = vadd.f32 %v378, %v503
    %v629 = vadd.f32 %v379, %v504
    %v630 = vadd.f32 %v380, %v505
    %v631 = vadd.f32 %v381, %v506
    %v632 = vadd.f32 %v382, %v507
    %v633 = vadd.f32 %v383, %v508
    %v634 = vadd.f32 %v384, %v509
    %v635 = vadd.f32 %v385, %v510
    %v636 = vadd.f32 %v386, %v511
    %v637 = vadd.f32 %v387, %v512
    %v638 = vadd.f32 %v388, %v513
    %v639 = vadd.f32 %v389, %v514
    %v640 = vadd.f32 %v390, %v515
    %v641 = vadd.f32 %v391, %v516
    %v642 = vadd.f32 %v392, %v517
    %v643 = vadd.f32 %v393, %v518
    %v644 = vadd.f32 %v394, %v519
    %v645 = vadd.f32 %v395, %v520
    %v646 = vadd.f32 %v396, %v521
    %v647 = vadd.f32 %v397, %v522
    %v648 = vadd.f32 %v398, %v523
    %v649 = vadd.f32 %v399, %v524
    %v650 = vadd.f32 %v400, %v525
    %v651 = vadd.f32 %v401, %v526
    %v652 = vadd.f32 %v402, %v527
    %v653 = vadd.f32 %v403, %v528
    %v654 = vadd.f32 %v404, %v529
    %v655 = vadd.f32 %v405, %v530
    %v656 = vadd.f32 %v406, %v531
    %v657 = vadd.f32 %v407, %v532
    %v658 = vadd.f32 %v408, %v533
    %v659 = vadd.f32 %v409, %v534
    %v660 = vadd.f32 %v410, %v535
    %v661 = vadd.f32 %v411, %v536
    %662 = vst [vmem:[#allocation2] sm:$0xff] %v537
    %663 = vst [vmem:[#allocation2 + $0x8] sm:$0xff] %v538
    %664 = vst [vmem:[#allocation2 + $0x10] sm:$0xff] %v539
    %665 = vst [vmem:[#allocation2 + $0x18] sm:$0xff] %v540
    %666 = vst [vmem:[#allocation2 + $0x20] sm:$0xff] %v541
    %667 = vst [vmem:[#allocation2 + $0x28] sm:$0xff] %v542
    %668 = vst [vmem:[#allocation2 + $0x30] sm:$0xff] %v543
    %669 = vst [vmem:[#allocation2 + $0x38] sm:$0xff] %v544
    %670 = vst [vmem:[#allocation2 + $0x40] sm:$0xff] %v545
    %671 = vst [vmem:[#allocation2 + $0x48] sm:$0xff] %v546
    %672 = vst [vmem:[#allocation2 + $0x50] sm:$0xff] %v547
    %673 = vst [vmem:[#allocation2 + $0x58] sm:$0xff] %v548
    %674 = vst [vmem:[#allocation2 + $0x60] sm:$0xff] %v549
    %675 = vst [vmem:[#allocation2 + $0x68] sm:$0xff] %v550
    %676 = vst [vmem:[#allocation2 + $0x70] sm:$0xff] %v551
    %677 = vst [vmem:[#allocation2 + $0x78] sm:$0xff] %v552
    %678 = vst [vmem:[#allocation2 + $0x80] sm:$0xff] %v553
    %679 = vst [vmem:[#allocation2 + $0x88] sm:$0xff] %v554
    %680 = vst [vmem:[#allocation2 + $0x90] sm:$0xff] %v555
    %681 = vst [vmem:[#allocation2 + $0x98] sm:$0xff] %v556
    %682 = vst [vmem:[#allocation2 + $0xa0] sm:$0xff] %v557
    %683 = vst [vmem:[#allocation2 + $0xa8] sm:$0xff] %v558
    %684 = vst [vmem:[#allocation2 + $0xb0] sm:$0xff] %v559
    %685 = vst [vmem:[#allocation2 + $0xb8] sm:$0xff] %v560
    %686 = vst [vmem:[#allocation2 + $0xc0] sm:$0xff] %v561
    %687 = vst [vmem:[#allocation2 + $0xc8] sm:$0xff] %v562
    %688 = vst [vmem:[#allocation2 + $0xd0] sm:$0xff] %v563
    %689 = vst [vmem:[#allocation2 + $0xd8] sm:$0xff] %v564
    %690 = vst [vmem:[#allocation2 + $0xe0] sm:$0xff] %v565
    %691 = vst [vmem:[#allocation2 + $0xe8] sm:$0xff] %v566
    %692 = vst [vmem:[#allocation2 + $0xf0] sm:$0xff] %v567
    %693 = vst [vmem:[#allocation2 + $0xf8] sm:$0xff] %v568
    %694 = vst [vmem:[#allocation2 + $0x100] sm:$0xff] %v569
    %695 = vst [vmem:[#allocation2 + $0x108] sm:$0xff] %v570
    %696 = vst [vmem:[#allocation2 + $0x110] sm:$0xff] %v571
    %697 = vst [vmem:[#allocation2 + $0x118] sm:$0xff] %v572
    %698 = vst [vmem:[#allocation2 + $0x120] sm:$0xff] %v573
    %699 = vst [vmem:[#allocation2 + $0x128] sm:$0xff] %v574
    %700 = vst [vmem:[#allocation2 + $0x130] sm:$0xff] %v575
    %701 = vst [vmem:[#allocation2 + $0x138] sm:$0xff] %v576
    %702 = vst [vmem:[#allocation2 + $0x140] sm:$0xff] %v577
    %703 = vst [vmem:[#allocation2 + $0x148] sm:$0xff] %v578
    %704 = vst [vmem:[#allocation2 + $0x150] sm:$0xff] %v579
    %705 = vst [vmem:[#allocation2 + $0x158] sm:$0xff] %v580
    %706 = vst [vmem:[#allocation2 + $0x160] sm:$0xff] %v581
    %707 = vst [vmem:[#allocation2 + $0x168] sm:$0xff] %v582
    %708 = vst [vmem:[#allocation2 + $0x170] sm:$0xff] %v583
    %709 = vst [vmem:[#allocation2 + $0x178] sm:$0xff] %v584
    %710 = vst [vmem:[#allocation2 + $0x180] sm:$0xff] %v585
    %711 = vst [vmem:[#allocation2 + $0x188] sm:$0xff] %v586
    %712 = vst [vmem:[#allocation2 + $0x190] sm:$0xff] %v587
    %713 = vst [vmem:[#allocation2 + $0x198] sm:$0xff] %v588
    %714 = vst [vmem:[#allocation2 + $0x1a0] sm:$0xff] %v589
    %715 = vst [vmem:[#allocation2 + $0x1a8] sm:$0xff] %v590
    %716 = vst [vmem:[#allocation2 + $0x1b0] sm:$0xff] %v591
    %717 = vst [vmem:[#allocation2 + $0x1b8] sm:$0xff] %v592
    %718 = vst [vmem:[#allocation2 + $0x1c0] sm:$0xff] %v593
    %719 = vst [vmem:[#allocation2 + $0x1c8] sm:$0xff] %v594
    %720 = vst [vmem:[#allocation2 + $0x1d0] sm:$0xff] %v595
    %721 = vst [vmem:[#allocation2 + $0x1d8] sm:$0xff] %v596
    %722 = vst [vmem:[#allocation2 + $0x1e0] sm:$0xff] %v597
    %723 = vst [vmem:[#allocation2 + $0x1e8] sm:$0xff] %v598
    %724 = vst [vmem:[#allocation2 + $0x1f0] sm:$0xff] %v599
    %725 = vst [vmem:[#allocation2 + $0x1f8] sm:$0xff] %v600
    %726 = vst [vmem:[#allocation2 + $0x200] sm:$0xff] %v601
    %727 = vst [vmem:[#allocation2 + $0x208] sm:$0xff] %v602
    %728 = vst [vmem:[#allocation2 + $0x210] sm:$0xff] %v603
    %729 = vst [vmem:[#allocation2 + $0x218] sm:$0xff] %v604
    %730 = vst [vmem:[#allocation2 + $0x220] sm:$0xff] %v605
    %731 = vst [vmem:[#allocation2 + $0x228] sm:$0xff] %v606
    %732 = vst [vmem:[#allocation2 + $0x230] sm:$0xff] %v607
    %733 = vst [vmem:[#allocation2 + $0x238] sm:$0xff] %v608
    %734 = vst [vmem:[#allocation2 + $0x240] sm:$0xff] %v609
    %735 = vst [vmem:[#allocation2 + $0x248] sm:$0xff] %v610
    %736 = vst [vmem:[#allocation2 + $0x250] sm:$0xff] %v611
    %737 = vst [vmem:[#allocation2 + $0x258] sm:$0xff] %v612
    %738 = vst [vmem:[#allocation2 + $0x260] sm:$0xff] %v613
    %739 = vst [vmem:[#allocation2 + $0x268] sm:$0xff] %v614
    %740 = vst [vmem:[#allocation2 + $0x270] sm:$0xff] %v615
    %741 = vst [vmem:[#allocation2 + $0x278] sm:$0xff] %v616
    %742 = vst [vmem:[#allocation2 + $0x280] sm:$0xff] %v617
    %743 = vst [vmem:[#allocation2 + $0x288] sm:$0xff] %v618
    %744 = vst [vmem:[#allocation2 + $0x290] sm:$0xff] %v619
    %745 = vst [vmem:[#allocation2 + $0x298] sm:$0xff] %v620
    %746 = vst [vmem:[#allocation2 + $0x2a0] sm:$0xff] %v621
    %747 = vst [vmem:[#allocation2 + $0x2a8] sm:$0xff] %v622
    %748 = vst [vmem:[#allocation2 + $0x2b0] sm:$0xff] %v623
    %749 = vst [vmem:[#allocation2 + $0x2b8] sm:$0xff] %v624
    %750 = vst [vmem:[#allocation2 + $0x2c0] sm:$0xff] %v625
    %751 = vst [vmem:[#allocation2 + $0x2c8] sm:$0xff] %v626
    %752 = vst [vmem:[#allocation2 + $0x2d0] sm:$0xff] %v627
    %753 = vst [vmem:[#allocation2 + $0x2d8] sm:$0xff] %v628
    %754 = vst [vmem:[#allocation2 + $0x2e0] sm:$0xff] %v629
    %755 = vst [vmem:[#allocation2 + $0x2e8] sm:$0xff] %v630
    %756 = vst [vmem:[#allocation2 + $0x2f0] sm:$0xff] %v631
    %757 = vst [vmem:[#allocation2 + $0x2f8] sm:$0xff] %v632
    %758 = vst [vmem:[#allocation2 + $0x300] sm:$0xff] %v633
    %759 = vst [vmem:[#allocation2 + $0x308] sm:$0xff] %v634
    %760 = vst [vmem:[#allocation2 + $0x310] sm:$0xff] %v635
    %761 = vst [vmem:[#allocation2 + $0x318] sm:$0xff] %v636
    %762 = vst [vmem:[#allocation2 + $0x320] sm:$0xff] %v637
    %763 = vst [vmem:[#allocation2 + $0x328] sm:$0xff] %v638
    %764 = vst [vmem:[#allocation2 + $0x330] sm:$0xff] %v639
    %765 = vst [vmem:[#allocation2 + $0x338] sm:$0xff] %v640
    %766 = vst [vmem:[#allocation2 + $0x340] sm:$0xff] %v641
    %767 = vst [vmem:[#allocation2 + $0x348] sm:$0xff] %v642
    %768 = vst [vmem:[#allocation2 + $0x350] sm:$0xff] %v643
    %769 = vst [vmem:[#allocation2 + $0x358] sm:$0xff] %v644
    %770 = vst [vmem:[#allocation2 + $0x360] sm:$0xff] %v645
    %771 = vst [vmem:[#allocation2 + $0x368] sm:$0xff] %v646
    %772 = vst [vmem:[#allocation2 + $0x370] sm:$0xff] %v647
    %773 = vst [vmem:[#allocation2 + $0x378] sm:$0xff] %v648
    %774 = vst [vmem:[#allocation2 + $0x380] sm:$0xff] %v649
    %775 = vst [vmem:[#allocation2 + $0x388] sm:$0xff] %v650
    %776 = vst [vmem:[#allocation2 + $0x390] sm:$0xff] %v651
    %777 = vst [vmem:[#allocation2 + $0x398] sm:$0xff] %v652
    %778 = vst [vmem:[#allocation2 + $0x3a0] sm:$0xff] %v653
    %779 = vst [vmem:[#allocation2 + $0x3a8] sm:$0xff] %v654
    %780 = vst [vmem:[#allocation2 + $0x3b0] sm:$0xff] %v655
    %781 = vst [vmem:[#allocation2 + $0x3b8] sm:$0xff] %v656
    %782 = vst [vmem:[#allocation2 + $0x3c0] sm:$0xff] %v657
    %783 = vst [vmem:[#allocation2 + $0x3c8] sm:$0xff] %v658
    %784 = vst [vmem:[#allocation2 + $0x3d0] sm:$0xff] %v659
    %785 = vst [vmem:[#allocation2 + $0x3d8] sm:$0xff] %v660
    %786 = vst [vmem:[#allocation2 + $0x3e0] sm:$0xff] %v661
    // Predicated region
    $region14: #{tpu_custom_call.1} parent=1 // pred_check
      %p787 = pneg %p33
    $region15: #{tpu_custom_call.1} parent=1 // pred_check_branch
      %789 = sbr.rel (%p787) target = $region17
    $region16: #{tpu_custom_call.1} parent=1 // pred_region
      %v790 = vld [vmem:[#allocation2] sm:$0xff]
      %v791 = vld [vmem:[#allocation2 + $0x8] sm:$0xff]
      %v792 = vld [vmem:[#allocation2 + $0x10] sm:$0xff]
      %v793 = vld [vmem:[#allocation2 + $0x18] sm:$0xff]
      %v794 = vld [vmem:[#allocation2 + $0x20] sm:$0xff]
      %v795 = vld [vmem:[#allocation2 + $0x28] sm:$0xff]
      %v796 = vld [vmem:[#allocation2 + $0x30] sm:$0xff]
      %v797 = vld [vmem:[#allocation2 + $0x38] sm:$0xff]
      %v798 = vld [vmem:[#allocation2 + $0x40] sm:$0xff]
      %v799 = vld [vmem:[#allocation2 + $0x48] sm:$0xff]
      %v800 = vld [vmem:[#allocation2 + $0x50] sm:$0xff]
      %v801 = vld [vmem:[#allocation2 + $0x58] sm:$0xff]
      %v802 = vld [vmem:[#allocation2 + $0x60] sm:$0xff]
      %v803 = vld [vmem:[#allocation2 + $0x68] sm:$0xff]
      %v804 = vld [vmem:[#allocation2 + $0x70] sm:$0xff]
      %v805 = vld [vmem:[#allocation2 + $0x78] sm:$0xff]
      %v806 = vld [vmem:[#allocation2 + $0x80] sm:$0xff]
      %v807 = vld [vmem:[#allocation2 + $0x88] sm:$0xff]
      %v808 = vld [vmem:[#allocation2 + $0x90] sm:$0xff]
      %v809 = vld [vmem:[#allocation2 + $0x98] sm:$0xff]
      %v810 = vld [vmem:[#allocation2 + $0xa0] sm:$0xff]
      %v811 = vld [vmem:[#allocation2 + $0xa8] sm:$0xff]
      %v812 = vld [vmem:[#allocation2 + $0xb0] sm:$0xff]
      %v813 = vld [vmem:[#allocation2 + $0xb8] sm:$0xff]
      %v814 = vld [vmem:[#allocation2 + $0xc0] sm:$0xff]
      %v815 = vld [vmem:[#allocation2 + $0xc8] sm:$0xff]
      %v816 = vld [vmem:[#allocation2 + $0xd0] sm:$0xff]
      %v817 = vld [vmem:[#allocation2 + $0xd8] sm:$0xff]
      %v818 = vld [vmem:[#allocation2 + $0xe0] sm:$0xff]
      %v819 = vld [vmem:[#allocation2 + $0xe8] sm:$0xff]
      %v820 = vld [vmem:[#allocation2 + $0xf0] sm:$0xff]
      %v821 = vld [vmem:[#allocation2 + $0xf8] sm:$0xff]
      %v822 = vld [vmem:[#allocation2 + $0x100] sm:$0xff]
      %v823 = vld [vmem:[#allocation2 + $0x108] sm:$0xff]
      %v824 = vld [vmem:[#allocation2 + $0x110] sm:$0xff]
      %v825 = vld [vmem:[#allocation2 + $0x118] sm:$0xff]
      %v826 = vld [vmem:[#allocation2 + $0x120] sm:$0xff]
      %v827 = vld [vmem:[#allocation2 + $0x128] sm:$0xff]
      %v828 = vld [vmem:[#allocation2 + $0x130] sm:$0xff]
      %v829 = vld [vmem:[#allocation2 + $0x138] sm:$0xff]
      %v830 = vld [vmem:[#allocation2 + $0x140] sm:$0xff]
      %v831 = vld [vmem:[#allocation2 + $0x148] sm:$0xff]
      %v832 = vld [vmem:[#allocation2 + $0x150] sm:$0xff]
      %v833 = vld [vmem:[#allocation2 + $0x158] sm:$0xff]
      %v834 = vld [vmem:[#allocation2 + $0x160] sm:$0xff]
      %v835 = vld [vmem:[#allocation2 + $0x168] sm:$0xff]
      %v836 = vld [vmem:[#allocation2 + $0x170] sm:$0xff]
      %v837 = vld [vmem:[#allocation2 + $0x178] sm:$0xff]
      %v838 = vld [vmem:[#allocation2 + $0x180] sm:$0xff]
      %v839 = vld [vmem:[#allocation2 + $0x188] sm:$0xff]
      %v840 = vld [vmem:[#allocation2 + $0x190] sm:$0xff]
      %v841 = vld [vmem:[#allocation2 + $0x198] sm:$0xff]
      %v842 = vld [vmem:[#allocation2 + $0x1a0] sm:$0xff]
      %v843 = vld [vmem:[#allocation2 + $0x1a8] sm:$0xff]
      %v844 = vld [vmem:[#allocation2 + $0x1b0] sm:$0xff]
      %v845 = vld [vmem:[#allocation2 + $0x1b8] sm:$0xff]
      %v846 = vld [vmem:[#allocation2 + $0x1c0] sm:$0xff]
      %v847 = vld [vmem:[#allocation2 + $0x1c8] sm:$0xff]
      %v848 = vld [vmem:[#allocation2 + $0x1d0] sm:$0xff]
      %v849 = vld [vmem:[#allocation2 + $0x1d8] sm:$0xff]
      %v850 = vld [vmem:[#allocation2 + $0x1e0] sm:$0xff]
      %v851 = vld [vmem:[#allocation2 + $0x1e8] sm:$0xff]
      %v852 = vld [vmem:[#allocation2 + $0x1f0] sm:$0xff]
      %v853 = vld [vmem:[#allocation2 + $0x1f8] sm:$0xff]
      %v854 = vld [vmem:[#allocation2 + $0x200] sm:$0xff]
      %v855 = vld [vmem:[#allocation2 + $0x208] sm:$0xff]
      %v856 = vld [vmem:[#allocation2 + $0x210] sm:$0xff]
      %v857 = vld [vmem:[#allocation2 + $0x218] sm:$0xff]
      %v858 = vld [vmem:[#allocation2 + $0x220] sm:$0xff]
      %v859 = vld [vmem:[#allocation2 + $0x228] sm:$0xff]
      %v860 = vld [vmem:[#allocation2 + $0x230] sm:$0xff]
      %v861 = vld [vmem:[#allocation2 + $0x238] sm:$0xff]
      %v862 = vld [vmem:[#allocation2 + $0x240] sm:$0xff]
      %v863 = vld [vmem:[#allocation2 + $0x248] sm:$0xff]
      %v864 = vld [vmem:[#allocation2 + $0x250] sm:$0xff]
      %v865 = vld [vmem:[#allocation2 + $0x258] sm:$0xff]
      %v866 = vld [vmem:[#allocation2 + $0x260] sm:$0xff]
      %v867 = vld [vmem:[#allocation2 + $0x268] sm:$0xff]
      %v868 = vld [vmem:[#allocation2 + $0x270] sm:$0xff]
      %v869 = vld [vmem:[#allocation2 + $0x278] sm:$0xff]
      %v870 = vld [vmem:[#allocation2 + $0x280] sm:$0xff]
      %v871 = vld [vmem:[#allocation2 + $0x288] sm:$0xff]
      %v872 = vld [vmem:[#allocation2 + $0x290] sm:$0xff]
      %v873 = vld [vmem:[#allocation2 + $0x298] sm:$0xff]
      %v874 = vld [vmem:[#allocation2 + $0x2a0] sm:$0xff]
      %v875 = vld [vmem:[#allocation2 + $0x2a8] sm:$0xff]
      %v876 = vld [vmem:[#allocation2 + $0x2b0] sm:$0xff]
      %v877 = vld [vmem:[#allocation2 + $0x2b8] sm:$0xff]
      %v878 = vld [vmem:[#allocation2 + $0x2c0] sm:$0xff]
      %v879 = vld [vmem:[#allocation2 + $0x2c8] sm:$0xff]
      %v880 = vld [vmem:[#allocation2 + $0x2d0] sm:$0xff]
      %v881 = vld [vmem:[#allocation2 + $0x2d8] sm:$0xff]
      %v882 = vld [vmem:[#allocation2 + $0x2e0] sm:$0xff]
      %v883 = vld [vmem:[#allocation2 + $0x2e8] sm:$0xff]
      %v884 = vld [vmem:[#allocation2 + $0x2f0] sm:$0xff]
      %v885 = vld [vmem:[#allocation2 + $0x2f8] sm:$0xff]
      %v886 = vld [vmem:[#allocation2 + $0x300] sm:$0xff]
      %v887 = vld [vmem:[#allocation2 + $0x308] sm:$0xff]
      %v888 = vld [vmem:[#allocation2 + $0x310] sm:$0xff]
      %v889 = vld [vmem:[#allocation2 + $0x318] sm:$0xff]
      %v890 = vld [vmem:[#allocation2 + $0x320] sm:$0xff]
      %v891 = vld [vmem:[#allocation2 + $0x328] sm:$0xff]
      %v892 = vld [vmem:[#allocation2 + $0x330] sm:$0xff]
      %v893 = vld [vmem:[#allocation2 + $0x338] sm:$0xff]
      %v894 = vld [vmem:[#allocation2 + $0x340] sm:$0xff]
      %v895 = vld [vmem:[#allocation2 + $0x348] sm:$0xff]
      %v896 = vld [vmem:[#allocation2 + $0x350] sm:$0xff]
      %v897 = vld [vmem:[#allocation2 + $0x358] sm:$0xff]
      %v898 = vld [vmem:[#allocation2 + $0x360] sm:$0xff]
      %v899 = vld [vmem:[#allocation2 + $0x368] sm:$0xff]
      %v900 = vld [vmem:[#allocation2 + $0x370] sm:$0xff]
      %v901 = vld [vmem:[#allocation2 + $0x378] sm:$0xff]
      %v902 = vld [vmem:[#allocation2 + $0x380] sm:$0xff]
      %v903 = vld [vmem:[#allocation2 + $0x388] sm:$0xff]
      %v904 = vld [vmem:[#allocation2 + $0x390] sm:$0xff]
      %v905 = vld [vmem:[#allocation2 + $0x398] sm:$0xff]
      %v906 = vld [vmem:[#allocation2 + $0x3a0] sm:$0xff]
      %v907 = vld [vmem:[#allocation2 + $0x3a8] sm:$0xff]
      %v908 = vld [vmem:[#allocation2 + $0x3b0] sm:$0xff]
      %v909 = vld [vmem:[#allocation2 + $0x3b8] sm:$0xff]
      %v910 = vld [vmem:[#allocation2 + $0x3c0] sm:$0xff]
      %v911 = vld [vmem:[#allocation2 + $0x3c8] sm:$0xff]
      %v912 = vld [vmem:[#allocation2 + $0x3d0] sm:$0xff]
      %v913 = vld [vmem:[#allocation2 + $0x3d8] sm:$0xff]
      %v914 = vld [vmem:[#allocation2 + $0x3e0] sm:$0xff]
      %v915 = vadd.f32 %v790, %v791
      %v916 = vadd.f32 %v915, %v792
      %v917 = vadd.f32 %v916, %v793
      %v918 = vadd.f32 %v917, %v794
      %v919 = vadd.f32 %v918, %v795
      %v920 = vadd.f32 %v919, %v796
      %v921 = vadd.f32 %v920, %v797
      %v922 = vadd.f32 %v921, %v798
      %v923 = vadd.f32 %v922, %v799
      %v924 = vadd.f32 %v923, %v800
      %v925 = vadd.f32 %v924, %v801
      %v926 = vadd.f32 %v925, %v802
      %v927 = vadd.f32 %v926, %v803
      %v928 = vadd.f32 %v927, %v804
      %v929 = vadd.f32 %v928, %v805
      %v930 = vadd.f32 %v929, %v806
      %v931 = vadd.f32 %v930, %v807
      %v932 = vadd.f32 %v931, %v808
      %v933 = vadd.f32 %v932, %v809
      %v934 = vadd.f32 %v933, %v810
      %v935 = vadd.f32 %v934, %v811
      %v936 = vadd.f32 %v935, %v812
      %v937 = vadd.f32 %v936, %v813
      %v938 = vadd.f32 %v937, %v814
      %v939 = vadd.f32 %v938, %v815
      %v940 = vadd.f32 %v939, %v816
      %v941 = vadd.f32 %v940, %v817
      %v942 = vadd.f32 %v941, %v818
      %v943 = vadd.f32 %v942, %v819
      %v944 = vadd.f32 %v943, %v820
      %v945 = vadd.f32 %v944, %v821
      %v946 = vadd.f32 %v945, %v822
      %v947 = vadd.f32 %v946, %v823
      %v948 = vadd.f32 %v947, %v824
      %v949 = vadd.f32 %v948, %v825
      %v950 = vadd.f32 %v949, %v826
      %v951 = vadd.f32 %v950, %v827
      %v952 = vadd.f32 %v951, %v828
      %v953 = vadd.f32 %v952, %v829
      %v954 = vadd.f32 %v953, %v830
      %v955 = vadd.f32 %v954, %v831
      %v956 = vadd.f32 %v955, %v832
      %v957 = vadd.f32 %v956, %v833
      %v958 = vadd.f32 %v957, %v834
      %v959 = vadd.f32 %v958, %v835
      %v960 = vadd.f32 %v959, %v836
      %v961 = vadd.f32 %v960, %v837
      %v962 = vadd.f32 %v961, %v838
      %v963 = vadd.f32 %v962, %v839
      %v964 = vadd.f32 %v963, %v840
      %v965 = vadd.f32 %v964, %v841
      %v966 = vadd.f32 %v965, %v842
      %v967 = vadd.f32 %v966, %v843
      %v968 = vadd.f32 %v967, %v844
      %v969 = vadd.f32 %v968, %v845
      %v970 = vadd.f32 %v969, %v846
      %v971 = vadd.f32 %v970, %v847
      %v972 = vadd.f32 %v971, %v848
      %v973 = vadd.f32 %v972, %v849
      %v974 = vadd.f32 %v973, %v850
      %v975 = vadd.f32 %v974, %v851
      %v976 = vadd.f32 %v975, %v852
      %v977 = vadd.f32 %v976, %v853
      %v978 = vadd.f32 %v977, %v854
      %v979 = vadd.f32 %v978, %v855
      %v980 = vadd.f32 %v979, %v856
      %v981 = vadd.f32 %v980, %v857
      %v982 = vadd.f32 %v981, %v858
      %v983 = vadd.f32 %v982, %v859
      %v984 = vadd.f32 %v983, %v860
      %v985 = vadd.f32 %v984, %v861
      %v986 = vadd.f32 %v985, %v862
      %v987 = vadd.f32 %v986, %v863
      %v988 = vadd.f32 %v987, %v864
      %v989 = vadd.f32 %v988, %v865
      %v990 = vadd.f32 %v989, %v866
      %v991 = vadd.f32 %v990, %v867
      %v992 = vadd.f32 %v991, %v868
      %v993 = vadd.f32 %v992, %v869
      %v994 = vadd.f32 %v993, %v870
      %v995 = vadd.f32 %v994, %v871
      %v996 = vadd.f32 %v995, %v872
      %v997 = vadd.f32 %v996, %v873
      %v998 = vadd.f32 %v997, %v874
      %v999 = vadd.f32 %v998, %v875
      %v1000 = vadd.f32 %v999, %v876
      %v1001 = vadd.f32 %v1000, %v877
      %v1002 = vadd.f32 %v1001, %v878
      %v1003 = vadd.f32 %v1002, %v879
      %v1004 = vadd.f32 %v1003, %v880
      %v1005 = vadd.f32 %v1004, %v881
      %v1006 = vadd.f32 %v1005, %v882
      %v1007 = vadd.f32 %v1006, %v883
      %v1008 = vadd.f32 %v1007, %v884
      %v1009 = vadd.f32 %v1008, %v885
      %v1010 = vadd.f32 %v1009, %v886
      %v1011 = vadd.f32 %v1010, %v887
      %v1012 = vadd.f32 %v1011, %v888
      %v1013 = vadd.f32 %v1012, %v889
      %v1014 = vadd.f32 %v1013, %v890
      %v1015 = vadd.f32 %v1014, %v891
      %v1016 = vadd.f32 %v1015, %v892
      %v1017 = vadd.f32 %v1016, %v893
      %v1018 = vadd.f32 %v1017, %v894
      %v1019 = vadd.f32 %v1018, %v895
      %v1020 = vadd.f32 %v1019, %v896
      %v1021 = vadd.f32 %v1020, %v897
      %v1022 = vadd.f32 %v1021, %v898
      %v1023 = vadd.f32 %v1022, %v899
      %v1024 = vadd.f32 %v1023, %v900
      %v1025 = vadd.f32 %v1024, %v901
      %v1026 = vadd.f32 %v1025, %v902
      %v1027 = vadd.f32 %v1026, %v903
      %v1028 = vadd.f32 %v1027, %v904
      %v1029 = vadd.f32 %v1028, %v905
      %v1030 = vadd.f32 %v1029, %v906
      %v1031 = vadd.f32 %v1030, %v907
      %v1032 = vadd.f32 %v1031, %v908
      %v1033 = vadd.f32 %v1032, %v909
      %v1034 = vadd.f32 %v1033, %v910
      %v1035 = vadd.f32 %v1034, %v911
      %v1036 = vadd.f32 %v1035, %v912
      %v1037 = vadd.f32 %v1036, %v913
      %v1038 = vadd.f32 %v1037, %v914
      %1039 = vadd.xlane.f32.xlu0 %v1038
      %v1040 = vpop.xlane.xlu0 %1039
      %v1041 = vrot.slane %v1040, 4
      %v1042 = vadd.f32 %v1040, %v1041
      %v1043 = vrot.slane %v1042, 2
      %v1044 = vadd.f32 %v1042, %v1043
      %v1045 = vrot.slane %v1044, 1
      %v1046 = vadd.f32 %v1044, %v1045
      %s1047 = vtos %v1046
      %v1048 = vstv %s1047
      %v1049 = vadd.f32 %v1048, 0.0
      %1050 = vst [vmem:[#allocation6] sm:$0xff] %v1049
    $region17: #{tpu_custom_call.1} parent=1 // pred_fallthru
      _
    // Predicated region
    $region18: #{tpu_custom_call.1} parent=1 // pred_check
      _
    $region19: #{tpu_custom_call.1} parent=1 // pred_check_branch
      %1052 = sbr.rel (0) target = $region21
    $region20: #{tpu_custom_call.1} parent=1 // pred_region
      %s1054 = ssub.s32 128, 128
      %1055 = vsyncadd [#allocation5], %s1054
      %s1057 = sshll.u32 [#allocation6], 4
      %s1058 = int_to_ptr.vmem [resolvable:$true] %s1057
      %1060 = dma.vmem_to_hbm [thread:$0]  %s1058, 128, %s1, [#allocation5]
    $region21: #{tpu_custom_call.1} parent=1 // pred_fallthru
      _
    // Predicated region
    $region22: #{tpu_custom_call.1} parent=1 // pred_check
      _
    $region23: #{tpu_custom_call.1} parent=1 // pred_check_branch
      %1062 = sbr.rel (0) target = $region25
    $region24: #{tpu_custom_call.1} parent=1 // pred_region
      %1063 = dma.done [#allocation5], 128
    $region25: #{tpu_custom_call.1} parent=1 // pred_fallthru
      _
    %1064 = vsyncpa [#allocation4], 1
    %1065 = vsyncpa [#allocation5], 1

</llo_original>
